<compile_context>
chip_gen: v5e
topology: v5e:2x2
jax: 0.10.0
libtpu: 0.0.40
codegen_flags: <defaults>
</compile_context>

<pallas_src>
import jax
import jax.numpy as jnp
from jax.experimental import pallas as pl
from jax.experimental.pallas import tpu as pltpu

BN_EPS = 1e-5


def _bn_train(h, g, b):
    """Training-mode BatchNorm1d (biased variance), folded into one FMA.

    One-pass variance: sum(h) and sum(h*h) are independent XLU reductions.
    """
    mu = jnp.mean(h, axis=0, keepdims=True)
    ms = jnp.mean(h * h, axis=0, keepdims=True)
    var = ms - mu * mu
    a = g * jax.lax.rsqrt(var + BN_EPS)   # [1, hdim]
    c = b - mu * a                        # [1, hdim]
    return h * a + c                      # single FMA on the [B, hdim] tensor


def dqn_kernel(x_ref, w1_ref, g1_ref, b1_ref,
               w2_ref, g2_ref, b2_ref,
               w3_ref, b3_ref, o_ref):
    x = x_ref[...].astype(jnp.float32)        # [B, 2]
    w1 = w1_ref[...]                          # [2, hdim]

    # ---- fc1 (no bias): K=2 -> two broadcast FMAs on the VPU, no MXU ----
    h = x[:, 0:1] * w1[0:1, :] + x[:, 1:2] * w1[1:2, :]
    h = jnp.maximum(h, 0.0)

    # ---- bn1 (training-mode batch statistics) ----
    h = _bn_train(h, g1_ref[...], b1_ref[...])

    # ---- fc2 (no bias) + ReLU : the only matmul worth the MXU ----
    h = jnp.dot(h, w2_ref[...], preferred_element_type=jnp.float32)
    h = jnp.maximum(h, 0.0)

    # ---- bn2 ----
    h = _bn_train(h, g2_ref[...], b2_ref[...])

    # ---- fc3 (with bias) ----
    o_ref[...] = (jnp.dot(h, w3_ref[...], preferred_element_type=jnp.float32)
                  + b3_ref[...])


# ----------------------------------------------------------------------------
# Parameter handling
# ----------------------------------------------------------------------------
def init_params(key, hdim=32):
    """Deterministic synthetic parameters, PyTorch-Linear-style uniform init."""
    k1, k2, k3, k4, k5, k6, k7 = jax.random.split(key, 7)

    def lin(k, out_f, in_f):
        bound = 1.0 / jnp.sqrt(jnp.float32(in_f))
        return jax.random.uniform(k, (out_f, in_f), jnp.float32, -bound, bound)

    return {
        "w1": lin(k1, hdim, 2),            # fc1.weight (hdim, 2)
        "w2": lin(k2, hdim, hdim),         # fc2.weight (hdim, hdim)
        "w3": lin(k3, 3, hdim),            # fc3.weight (3, hdim)
        "b3": jax.random.uniform(k4, (3,), jnp.float32,
                                 -1.0 / jnp.sqrt(jnp.float32(hdim)),
                                 1.0 / jnp.sqrt(jnp.float32(hdim))),
        # BatchNorm affine params (non-trivial but deterministic).
        "g1": 1.0 + 0.1 * jax.random.normal(k5, (hdim,), jnp.float32),
        "b1": 0.1 * jax.random.normal(k6, (hdim,), jnp.float32),
        "g2": 1.0 + 0.1 * jax.random.normal(k7, (hdim,), jnp.float32),
        "b2": jnp.zeros((hdim,), jnp.float32),
    }


def prepare_params(params):
    """Pre-transpose / pre-reshape ONCE so the forward wrapper does no
    relayout work per call (pure launch-overhead removal)."""
    hdim = params["w1"].shape[0]
    return {
        "w1t": jnp.asarray(params["w1"].T, jnp.float32),     # (2, hdim)
        "w2t": jnp.asarray(params["w2"].T, jnp.float32),     # (hdim, hdim)
        "w3t": jnp.asarray(params["w3"].T, jnp.float32),     # (hdim, 3)
        "g1": params["g1"].reshape(1, hdim).astype(jnp.float32),
        "b1": params["b1"].reshape(1, hdim).astype(jnp.float32),
        "g2": params["g2"].reshape(1, hdim).astype(jnp.float32),
        "b2": params["b2"].reshape(1, hdim).astype(jnp.float32),
        "b3": params["b3"].reshape(1, 3).astype(jnp.float32),
    }


def prepare_pair_params(prep_online, prep_target):
    """Stack two prepared parameter sets on a leading axis of size 2 (done once)."""
    return {k: jnp.stack([prep_online[k], prep_target[k]], axis=0)
            for k in prep_online}


_ARG_ORDER = ("w1t", "g1", "b1", "w2t", "g2", "b2", "w3t", "b3")


# ----------------------------------------------------------------------------
# Forward wrappers
# ----------------------------------------------------------------------------
def dqn_forward(x, prep):
    """Single-network forward. Mirrors DQN.forward, including the 1-D glue.

    Note: for a 1-D input (batch of 1), training-mode BN gives var=0 so the
    output collapses to the BN bias path; PyTorch BatchNorm1d would raise for
    batch size 1 in training mode.  We keep the silent behavior here.
    """
    x2 = (x if x.ndim == 2 else x.reshape(1, -1)).astype(jnp.float32)
    B = x2.shape[0]

    vmem = pl.BlockSpec(memory_space=pltpu.MemorySpace.VMEM)
    out = pl.pallas_call(
        dqn_kernel,
        out_shape=jax.ShapeDtypeStruct((B, 3), jnp.float32),
        in_specs=[vmem] * 9,
        out_specs=vmem,
    )(x2, *(prep[k] for k in _ARG_ORDER))

    return out if x.ndim == 2 else out.reshape(-1)


def dqn_forward_pair(x, pair_prep):
    """Fused online+target forward: one pallas_call, grid=(2,) over networks.

    The network axis is marked "parallel" (on v7x each TensorCore takes one
    network; elsewhere it just amortizes launch overhead).  The batch axis is
    NOT tiled — training-mode BN statistics are over the full batch.
    Returns (2, B, 3): [0] = online net, [1] = target net.
    """
    x2 = (x if x.ndim == 2 else x.reshape(1, -1)).astype(jnp.float32)
    B = x2.shape[0]
    hdim = pair_prep["w2t"].shape[-1]

    def nspec(*tail):
        # Leading (network) dim squeezed out of the kernel ref; per-grid-step
        # the index_map selects network `n`.
        return pl.BlockSpec((None,) + tail, lambda n: (n,) + (0,) * len(tail))

    x_spec = pl.BlockSpec((B, 2), lambda n: (0, 0))   # same block every step

    out = pl.pallas_call(
        dqn_kernel,
        out_shape=jax.ShapeDtypeStruct((2, B, 3), jnp.float32),
        grid=(2,),
        in_specs=[
            x_spec,
            nspec(2, hdim),      # w1t
            nspec(1, hdim),      # g1
            nspec(1, hdim),      # b1
            nspec(hdim, hdim),   # w2t
            nspec(1, hdim),      # g2
            nspec(1, hdim),      # b2
            nspec(hdim, 3),      # w3t
            nspec(1, 3),         # b3
        ],
        out_specs=pl.BlockSpec((None, B, 3), lambda n: (n, 0, 0)),
        compiler_params=pltpu.CompilerParams(
            dimension_semantics=("parallel",)),
    )(x2, *(pair_prep[k] for k in _ARG_ORDER))

    return out


# ----------------------------------------------------------------------------
# Pure-JAX reference (PyTorch semantics, centered variance)
# ----------------------------------------------------------------------------
def dqn_reference(x, params):
    x2 = (x if x.ndim == 2 else x.reshape(1, -1)).astype(jnp.float32)

    def bn(h, g, b):
        mu = jnp.mean(h, axis=0, keepdims=True)
        var = jnp.mean((h - mu) ** 2, axis=0, keepdims=True)
        return (h - mu) / jnp.sqrt(var + BN_EPS) * g + b

    h = jnp.maximum(x2 @ params["w1"].T, 0.0)
    h = bn(h, params["g1"], params["b1"])
    h = jnp.maximum(h @ params["w2"].T, 0.0)
    h = bn(h, params["g2"], params["b2"])
    out = h @ params["w3"].T + params["b3"]
    return out if x.ndim == 2 else out.reshape(-1)


if __name__ == "__main__":
    key = jax.random.PRNGKey(0)
    kx, kp_online, kp_target = jax.random.split(key, 3)

    B, HDIM = 8, 32
    # MountainCar state: (position, velocity) — 2 features per state.
    x = jax.random.normal(kx, (B, 2), jnp.float32)

    params_online = init_params(kp_online, hdim=HDIM)
    params_target = init_params(kp_target, hdim=HDIM)

    prep_online = prepare_params(params_online)
    prep_target = prepare_params(params_target)
    pair_prep = prepare_pair_params(prep_online, prep_target)

    # --- single-network forward ---
    out = jax.block_until_ready(dqn_forward(x, prep_online))
    ref = dqn_reference(x, params_online)
    assert out.shape == (B, 3), out.shape
    assert jnp.allclose(out, ref, atol=1e-4, rtol=1e-4), (out, ref)

    # --- fused online + target forward (one kernel launch for both nets) ---
    out_pair = jax.block_until_ready(dqn_forward_pair(x, pair_prep))
    ref_pair = jnp.stack([dqn_reference(x, params_online),
                          dqn_reference(x, params_target)], axis=0)
    assert out_pair.shape == (2, B, 3), out_pair.shape
    assert jnp.allclose(out_pair, ref_pair, atol=1e-4, rtol=1e-4), (out_pair, ref_pair)

    print("KERNEL_OK")
</pallas_src>

<mosaic_0001>
module attributes {stable_mosaic.version = 11 : i64} {
  func.func @dqn_kernel(%arg0: memref<8x2xf32, #tpu.memory_space<vmem>>, %arg1: memref<2x32xf32, #tpu.memory_space<vmem>>, %arg2: memref<1x32xf32, #tpu.memory_space<vmem>>, %arg3: memref<1x32xf32, #tpu.memory_space<vmem>>, %arg4: memref<32x32xf32, #tpu.memory_space<vmem>>, %arg5: memref<1x32xf32, #tpu.memory_space<vmem>>, %arg6: memref<1x32xf32, #tpu.memory_space<vmem>>, %arg7: memref<32x3xf32, #tpu.memory_space<vmem>>, %arg8: memref<1x3xf32, #tpu.memory_space<vmem>>, %arg9: memref<8x3xf32, #tpu.memory_space<vmem>>) attributes {dimension_semantics = [], scalar_prefetch = 0 : i64, scratch_operands = 0 : i64, tpu.core_type = #tpu.core_type<tc>} {
    %c0 = arith.constant 0 : index
    %c0_0 = arith.constant 0 : index
    %0 = vector.load %arg0[%c0, %c0_0] : memref<8x2xf32, #tpu.memory_space<vmem>>, vector<8x2xf32>
    %c0_1 = arith.constant 0 : index
    %c0_2 = arith.constant 0 : index
    %1 = vector.load %arg1[%c0_1, %c0_2] : memref<2x32xf32, #tpu.memory_space<vmem>>, vector<2x32xf32>
    %2 = vector.extract_strided_slice %0 {offsets = [0, 0], sizes = [8, 1], strides = [1, 1]} : vector<8x2xf32> to vector<8x1xf32>
    %3 = vector.extract_strided_slice %1 {offsets = [0, 0], sizes = [1, 32], strides = [1, 1]} : vector<2x32xf32> to vector<1x32xf32>
    %4 = vector.broadcast %2 : vector<8x1xf32> to vector<8x32xf32>
    %5 = vector.broadcast %3 : vector<1x32xf32> to vector<8x32xf32>
    %6 = arith.mulf %4, %5 : vector<8x32xf32>
    %7 = vector.extract_strided_slice %0 {offsets = [0, 1], sizes = [8, 1], strides = [1, 1]} : vector<8x2xf32> to vector<8x1xf32>
    %8 = vector.extract_strided_slice %1 {offsets = [1, 0], sizes = [1, 32], strides = [1, 1]} : vector<2x32xf32> to vector<1x32xf32>
    %9 = vector.broadcast %7 : vector<8x1xf32> to vector<8x32xf32>
    %10 = vector.broadcast %8 : vector<1x32xf32> to vector<8x32xf32>
    %11 = arith.mulf %9, %10 : vector<8x32xf32>
    %12 = arith.addf %6, %11 : vector<8x32xf32>
    %cst = arith.constant 0.000000e+00 : f32
    %13 = vector.broadcast %cst : f32 to vector<8x32xf32>
    %14 = arith.maximumf %12, %13 : vector<8x32xf32>
    %c0_3 = arith.constant 0 : index
    %c0_4 = arith.constant 0 : index
    %15 = vector.load %arg2[%c0_3, %c0_4] : memref<1x32xf32, #tpu.memory_space<vmem>>, vector<1x32xf32>
    %c0_5 = arith.constant 0 : index
    %c0_6 = arith.constant 0 : index
    %16 = vector.load %arg3[%c0_5, %c0_6] : memref<1x32xf32, #tpu.memory_space<vmem>>, vector<1x32xf32>
    %cst_7 = arith.constant dense<0.000000e+00> : vector<32xf32>
    %17 = vector.multi_reduction <add>, %14, %cst_7 [0] : vector<8x32xf32> to vector<32xf32>
    %18 = vector.shape_cast %17 : vector<32xf32> to vector<1x32xf32>
    %cst_8 = arith.constant 8.000000e+00 : f32
    %19 = vector.broadcast %cst_8 : f32 to vector<1x32xf32>
    %20 = arith.divf %18, %19 : vector<1x32xf32>
    %21 = arith.mulf %14, %14 : vector<8x32xf32>
    %cst_9 = arith.constant dense<0.000000e+00> : vector<32xf32>
    %22 = vector.multi_reduction <add>, %21, %cst_9 [0] : vector<8x32xf32> to vector<32xf32>
    %23 = vector.shape_cast %22 : vector<32xf32> to vector<1x32xf32>
    %cst_10 = arith.constant 8.000000e+00 : f32
    %24 = vector.broadcast %cst_10 : f32 to vector<1x32xf32>
    %25 = arith.divf %23, %24 : vector<1x32xf32>
    %26 = arith.mulf %20, %20 : vector<1x32xf32>
    %27 = arith.subf %25, %26 : vector<1x32xf32>
    %cst_11 = arith.constant 9.99999974E-6 : f32
    %28 = vector.broadcast %cst_11 : f32 to vector<1x32xf32>
    %29 = arith.addf %27, %28 : vector<1x32xf32>
    %30 = math.rsqrt %29 : vector<1x32xf32>
    %31 = arith.mulf %15, %30 : vector<1x32xf32>
    %32 = arith.mulf %20, %31 : vector<1x32xf32>
    %33 = arith.subf %16, %32 : vector<1x32xf32>
    %34 = vector.broadcast %31 : vector<1x32xf32> to vector<8x32xf32>
    %35 = arith.mulf %14, %34 : vector<8x32xf32>
    %36 = vector.broadcast %33 : vector<1x32xf32> to vector<8x32xf32>
    %37 = arith.addf %35, %36 : vector<8x32xf32>
    %c0_12 = arith.constant 0 : index
    %c0_13 = arith.constant 0 : index
    %38 = vector.load %arg4[%c0_12, %c0_13] : memref<32x32xf32, #tpu.memory_space<vmem>>, vector<32x32xf32>
    %cst_14 = arith.constant dense<0.000000e+00> : vector<8x32xf32>
    %39 = tpu.matmul %37, %38, %cst_14 {dimension_numbers = #tpu.dot_dimension_numbers<[1], [0], [0], [1], [0, 0, 1, 1], [], []>} : vector<8x32xf32>, vector<32x32xf32>, vector<8x32xf32> -> vector<8x32xf32>
    %cst_15 = arith.constant 0.000000e+00 : f32
    %40 = vector.broadcast %cst_15 : f32 to vector<8x32xf32>
    %41 = arith.maximumf %39, %40 : vector<8x32xf32>
    %c0_16 = arith.constant 0 : index
    %c0_17 = arith.constant 0 : index
    %42 = vector.load %arg5[%c0_16, %c0_17] : memref<1x32xf32, #tpu.memory_space<vmem>>, vector<1x32xf32>
    %c0_18 = arith.constant 0 : index
    %c0_19 = arith.constant 0 : index
    %43 = vector.load %arg6[%c0_18, %c0_19] : memref<1x32xf32, #tpu.memory_space<vmem>>, vector<1x32xf32>
    %cst_20 = arith.constant dense<0.000000e+00> : vector<32xf32>
    %44 = vector.multi_reduction <add>, %41, %cst_20 [0] : vector<8x32xf32> to vector<32xf32>
    %45 = vector.shape_cast %44 : vector<32xf32> to vector<1x32xf32>
    %cst_21 = arith.constant 8.000000e+00 : f32
    %46 = vector.broadcast %cst_21 : f32 to vector<1x32xf32>
    %47 = arith.divf %45, %46 : vector<1x32xf32>
    %48 = arith.mulf %41, %41 : vector<8x32xf32>
    %cst_22 = arith.constant dense<0.000000e+00> : vector<32xf32>
    %49 = vector.multi_reduction <add>, %48, %cst_22 [0] : vector<8x32xf32> to vector<32xf32>
    %50 = vector.shape_cast %49 : vector<32xf32> to vector<1x32xf32>
    %cst_23 = arith.constant 8.000000e+00 : f32
    %51 = vector.broadcast %cst_23 : f32 to vector<1x32xf32>
    %52 = arith.divf %50, %51 : vector<1x32xf32>
    %53 = arith.mulf %47, %47 : vector<1x32xf32>
    %54 = arith.subf %52, %53 : vector<1x32xf32>
    %cst_24 = arith.constant 9.99999974E-6 : f32
    %55 = vector.broadcast %cst_24 : f32 to vector<1x32xf32>
    %56 = arith.addf %54, %55 : vector<1x32xf32>
    %57 = math.rsqrt %56 : vector<1x32xf32>
    %58 = arith.mulf %42, %57 : vector<1x32xf32>
    %59 = arith.mulf %47, %58 : vector<1x32xf32>
    %60 = arith.subf %43, %59 : vector<1x32xf32>
    %61 = vector.broadcast %58 : vector<1x32xf32> to vector<8x32xf32>
    %62 = arith.mulf %41, %61 : vector<8x32xf32>
    %63 = vector.broadcast %60 : vector<1x32xf32> to vector<8x32xf32>
    %64 = arith.addf %62, %63 : vector<8x32xf32>
    %c0_25 = arith.constant 0 : index
    %c0_26 = arith.constant 0 : index
    %65 = vector.load %arg7[%c0_25, %c0_26] : memref<32x3xf32, #tpu.memory_space<vmem>>, vector<32x3xf32>
    %cst_27 = arith.constant dense<0.000000e+00> : vector<8x3xf32>
    %66 = tpu.matmul %64, %65, %cst_27 {dimension_numbers = #tpu.dot_dimension_numbers<[1], [0], [0], [1], [0, 0, 1, 1], [], []>} : vector<8x32xf32>, vector<32x3xf32>, vector<8x3xf32> -> vector<8x3xf32>
    %c0_28 = arith.constant 0 : index
    %c0_29 = arith.constant 0 : index
    %67 = vector.load %arg8[%c0_28, %c0_29] : memref<1x3xf32, #tpu.memory_space<vmem>>, vector<1x3xf32>
    %68 = vector.broadcast %67 : vector<1x3xf32> to vector<8x3xf32>
    %69 = arith.addf %66, %68 : vector<8x3xf32>
    %c0_30 = arith.constant 0 : index
    %c0_31 = arith.constant 0 : index
    %70 = vector.load %arg9[%c0_30, %c0_31] : memref<8x3xf32, #tpu.memory_space<vmem>>, vector<8x3xf32>
    tpu.vector_store %arg9[%c0_30, %c0_31], %69 {strides = array<i32>} : memref<8x3xf32, #tpu.memory_space<vmem>>, vector<8x3xf32>,
    return
  }
}

</mosaic_0001>

<llo_original>
// kernel: tpu_custom_call.1
$region0: #{tpu_custom_call.1}
  #allocation0 [shape = 'u32[]', space=smem, size = 0x4, offset = 0x4, fixed_abs, tag = 'smem constant byte address 0x4 - core index']
  #allocation1 [shape = 'u32[72,128]{1,0:T(1,128)}', space=vmem, size = 0x9000, scoped, tag = 'internal scratch']
  %s0 = inlined_call_operand.vmem [shape: f32[8,2], index: 0, kind: input, shape index: {}]
  %s1 = inlined_call_operand.vmem [shape: f32[2,32], index: 1, kind: input, shape index: {}]
  %s2 = inlined_call_operand.vmem [shape: f32[1,32], index: 2, kind: input, shape index: {}]
  %s3 = inlined_call_operand.vmem [shape: f32[1,32], index: 3, kind: input, shape index: {}]
  %s4 = inlined_call_operand.vmem [shape: f32[32,32], index: 4, kind: input, shape index: {}]
  %s5 = inlined_call_operand.vmem [shape: f32[1,32], index: 5, kind: input, shape index: {}]
  %s6 = inlined_call_operand.vmem [shape: f32[1,32], index: 6, kind: input, shape index: {}]
  %s7 = inlined_call_operand.vmem [shape: f32[32,3], index: 7, kind: input, shape index: {}]
  %s8 = inlined_call_operand.vmem [shape: f32[1,3], index: 8, kind: input, shape index: {}]
  %s9 = inlined_call_operand.vmem [shape: f32[8,3], index: 9, kind: output, shape index: {}]
  %s10 = sld [smem:[#allocation0]]
  $region46: #{tpu_custom_call.1} parent=0
    _
  %s12 = ssub.s32 1, %s10
  %s13 = scalar_select 0, %s12, %s10
  // Predicated region
  $region2: #{tpu_custom_call.1} parent=0 // pred_check
    _
  $region3: #{tpu_custom_call.1} parent=0 // pred_check_branch
    %15 = sbr.rel (0) target = $region5
  $region4: #{tpu_custom_call.1} parent=0 // pred_region
    _
  $region5: #{tpu_custom_call.1} parent=0 // pred_fallthru
    _
  // Predicated region
  $region6: #{tpu_custom_call.1} parent=0 // pred_check
    _
  $region7: #{tpu_custom_call.1} parent=0 // pred_check_branch
    %17 = sbr.rel (0) target = $region9
  $region8: #{tpu_custom_call.1} parent=0 // pred_region
    _
  $region9: #{tpu_custom_call.1} parent=0 // pred_fallthru
    _
  // Predicated region
  $region10: #{tpu_custom_call.1} parent=0 // pred_check
    _
  $region11: #{tpu_custom_call.1} parent=0 // pred_check_branch
    %19 = sbr.rel (0) target = $region13
  $region12: #{tpu_custom_call.1} parent=0 // pred_region
    _
  $region13: #{tpu_custom_call.1} parent=0 // pred_fallthru
    _
  // Predicated region
  $region14: #{tpu_custom_call.1} parent=0 // pred_check
    _
  $region15: #{tpu_custom_call.1} parent=0 // pred_check_branch
    %21 = sbr.rel (0) target = $region17
  $region16: #{tpu_custom_call.1} parent=0 // pred_region
    _
  $region17: #{tpu_custom_call.1} parent=0 // pred_fallthru
    _
  // Predicated region
  $region18: #{tpu_custom_call.1} parent=0 // pred_check
    _
  $region19: #{tpu_custom_call.1} parent=0 // pred_check_branch
    %23 = sbr.rel (0) target = $region21
  $region20: #{tpu_custom_call.1} parent=0 // pred_region
    _
  $region21: #{tpu_custom_call.1} parent=0 // pred_fallthru
    _
  // Predicated region
  $region22: #{tpu_custom_call.1} parent=0 // pred_check
    _
  $region23: #{tpu_custom_call.1} parent=0 // pred_check_branch
    %25 = sbr.rel (0) target = $region25
  $region24: #{tpu_custom_call.1} parent=0 // pred_region
    _
  $region25: #{tpu_custom_call.1} parent=0 // pred_fallthru
    _
  // Predicated region
  $region26: #{tpu_custom_call.1} parent=0 // pred_check
    _
  $region27: #{tpu_custom_call.1} parent=0 // pred_check_branch
    %27 = sbr.rel (0) target = $region29
  $region28: #{tpu_custom_call.1} parent=0 // pred_region
    _
  $region29: #{tpu_custom_call.1} parent=0 // pred_fallthru
    _
  // Predicated region
  $region30: #{tpu_custom_call.1} parent=0 // pred_check
    _
  $region31: #{tpu_custom_call.1} parent=0 // pred_check_branch
    %29 = sbr.rel (0) target = $region33
  $region32: #{tpu_custom_call.1} parent=0 // pred_region
    _
  $region33: #{tpu_custom_call.1} parent=0 // pred_fallthru
    _
  // Predicated region
  $region34: #{tpu_custom_call.1} parent=0 // pred_check
    _
  $region35: #{tpu_custom_call.1} parent=0 // pred_check_branch
    %31 = sbr.rel (0) target = $region37
  $region36: #{tpu_custom_call.1} parent=0 // pred_region
    _
  $region37: #{tpu_custom_call.1} parent=0 // pred_fallthru
    _
  %v32 = vld [vmem:[%s0] sm:$0xff]
  %v33 = vld [vmem:[%s1] sm:$0x3]
  %35 = vset.pattern.permute.xlu0 0
  %36 = vperm.xlu0 %35, %v32
  %v37 = vpop.permute.xlu0 %36
  %v39 = vperm.slane %v33, 0
  %v40 = vmul.f32 %v37, %v39
  %41 = vset.pattern.permute.xlu0 1
  %42 = vperm.xlu0 %41, %v32
  %v43 = vpop.permute.xlu0 %42
  %v45 = vperm.slane %v33, 1
  %v46 = vmul.f32 %v43, %v45
  %v47 = vadd.f32 %v40, %v46
  %v48 = vmax.f32 %v47, 0.0
  %v49 = vld [vmem:[%s2] sm:$0x1]
  %v50 = vld [vmem:[%s3] sm:$0x1]
  %vm51 = vcmask 261120
  %v52 = vsel %vm51, %v48, 0.0
  %v53 = vrot.slane %v52, 4
  %v54 = vadd.f32 %v52, %v53
  %v55 = vrot.slane %v54, 2
  %v56 = vadd.f32 %v54, %v55
  %v57 = vrot.slane %v56, 1
  %v58 = vadd.f32 %v56, %v57
  %v59 = vrcp.pop 8.0
  %v60 = vmul.f32 8.0, %v59
  %v61 = vsub.f32 1.0, %v60
  %v62 = vmul.f32 %v59, %v61
  %v63 = vadd.f32 %v59, %v62
  %vm64 = vweird.f32 %v59
  %v65 = vsel %vm64, %v59, %v63
  %v66 = vmul.f32 %v58, %v65
  %v67 = vmul.f32 %v48, %v48
  %v68 = vsel %vm51, %v67, 0.0
  %v69 = vrot.slane %v68, 4
  %v70 = vadd.f32 %v68, %v69
  %v71 = vrot.slane %v70, 2
  %v72 = vadd.f32 %v70, %v71
  %v73 = vrot.slane %v72, 1
  %v74 = vadd.f32 %v72, %v73
  %v75 = vmul.f32 %v74, %v65
  %v76 = vmul.f32 %v66, %v66
  %v77 = vsub.f32 %v75, %v76
  %v78 = vadd.f32 %v77, 1e-05
  %v79 = vrsqrt.pop %v78
  %v80 = vmul.f32 %v79, %v78
  %v81 = vmul.f32 %v80, %v79
  %v82 = vmul.f32 0.5, %v81
  %v83 = vsub.f32 1.5, %v82
  %v84 = vmul.f32 %v79, %v83
  %vm85 = vweird.f32 %v78
  %vm86 = vweird.f32 %v79
  %vm87 = vmor %vm85, %vm86
  %v88 = vsel %vm87, %v79, %v84
  %v89 = vmul.f32 %v49, %v88
  %v90 = vmul.f32 %v66, %v89
  %v91 = vsub.f32 %v50, %v90
  %v93 = vperm.slane %v89, 0
  %v95 = vmul.f32 %v48, %v93
  %v97 = vperm.slane %v91, 0
  %v99 = vadd.f32 %v95, %v97
  %v100 = vld [vmem:[%s4] sm:$0xff]
  %v101 = vld [vmem:[%s4 + $0x8] sm:$0xff]
  %v102 = vld [vmem:[%s4 + $0x10] sm:$0xff]
  %v103 = vld [vmem:[%s4 + $0x18] sm:$0xff]
  %v105 = vsel %vm51, %v99, 0
  %107 = vmatpush.msra.mxu0 0.0
  %108 = vmatpush.msra.mxu0 0.0
  %109 = vmatpush.msra.mxu0 0.0
  %110 = vmatpush.msra.mxu0 0.0
  %111 = vmatpush.msra.mxu0 0.0
  %112 = vmatpush.msra.mxu0 0.0
  %113 = vmatpush.msra.mxu0 0.0
  %114 = vmatpush.msra.mxu0 0.0
  %115 = vmatpush.msra.mxu0 0.0
  %116 = vmatpush.msra.mxu0 0.0
  %117 = vmatpush.msra.mxu0 0.0
  %118 = vmatpush.msra.mxu0 0.0
  %119 = vmatpush.msra.mxu0 %v103
  %120 = vmatpush.msra.mxu0 %v102
  %121 = vmatpush.msra.mxu0 %v101
  %122 = vmatpush.msra.mxu0 %v100
  %123 = vmatmul.f32.gmra.mxu0 %v105
  %v124 = vpop.f32.mrf.mxu0
  %v125 = vadd.f32 0.0, %v124
  %126 = vdwg.mxu0
  %v127 = vmax.f32 %v125, 0.0
  %v128 = vld [vmem:[%s5] sm:$0x1]
  %v129 = vld [vmem:[%s6] sm:$0x1]
  %v130 = vsel %vm51, %v127, 0.0
  %v131 = vrot.slane %v130, 4
  %v132 = vadd.f32 %v130, %v131
  %v133 = vrot.slane %v132, 2
  %v134 = vadd.f32 %v132, %v133
  %v135 = vrot.slane %v134, 1
  %v136 = vadd.f32 %v134, %v135
  %v137 = vmul.f32 %v136, %v65
  %v138 = vmul.f32 %v127, %v127
  %v139 = vsel %vm51, %v138, 0.0
  %v140 = vrot.slane %v139, 4
  %v141 = vadd.f32 %v139, %v140
  %v142 = vrot.slane %v141, 2
  %v143 = vadd.f32 %v141, %v142
  %v144 = vrot.slane %v143, 1
  %v145 = vadd.f32 %v143, %v144
  %v146 = vmul.f32 %v145, %v65
  %v147 = vmul.f32 %v137, %v137
  %v148 = vsub.f32 %v146, %v147
  %v149 = vadd.f32 %v148, 1e-05
  %v150 = vrsqrt.pop %v149
  %v151 = vmul.f32 %v150, %v149
  %v152 = vmul.f32 %v151, %v150
  %v153 = vmul.f32 0.5, %v152
  %v154 = vsub.f32 1.5, %v153
  %v155 = vmul.f32 %v150, %v154
  %vm156 = vweird.f32 %v149
  %vm157 = vweird.f32 %v150
  %vm158 = vmor %vm156, %vm157
  %v159 = vsel %vm158, %v150, %v155
  %v160 = vmul.f32 %v128, %v159
  %v161 = vmul.f32 %v137, %v160
  %v162 = vsub.f32 %v129, %v161
  %v164 = vperm.slane %v160, 0
  %v166 = vmul.f32 %v127, %v164
  %v168 = vperm.slane %v162, 0
  %v170 = vadd.f32 %v166, %v168
  %v171 = vld [vmem:[%s7] sm:$0xff]
  %v172 = vld [vmem:[%s7 + $0x8] sm:$0xff]
  %v173 = vld [vmem:[%s7 + $0x10] sm:$0xff]
  %v174 = vld [vmem:[%s7 + $0x18] sm:$0xff]
  %v175 = vld [vmem:[%s8] sm:$0x1]
  %v177 = vperm.slane %v175, 0
  %v180 = vsel %vm51, %v170, 0
  %182 = vmatpush.msra.mxu0 0.0
  %183 = vmatpush.msra.mxu0 0.0
  %184 = vmatpush.msra.mxu0 0.0
  %185 = vmatpush.msra.mxu0 0.0
  %186 = vmatpush.msra.mxu0 0.0
  %187 = vmatpush.msra.mxu0 0.0
  %188 = vmatpush.msra.mxu0 0.0
  %189 = vmatpush.msra.mxu0 0.0
  %190 = vmatpush.msra.mxu0 0.0
  %191 = vmatpush.msra.mxu0 0.0
  %192 = vmatpush.msra.mxu0 0.0
  %193 = vmatpush.msra.mxu0 0.0
  %194 = vmatpush.msra.mxu0 %v174
  %195 = vmatpush.msra.mxu0 %v173
  %196 = vmatpush.msra.mxu0 %v172
  %197 = vmatpush.msra.mxu0 %v171
  %198 = vmatmul.f32.gmra.mxu0 %v180
  %v199 = vpop.f32.mrf.mxu0
  %v200 = vadd.f32 %v177, %v199
  %201 = vdwg.mxu0
  %vm202 = vcmask 23552
  %203 = vst.msk [vmem:[%s9] sm:$0xff] %vm202, %v200
  // Predicated region
  $region38: #{tpu_custom_call.1} parent=0 // pred_check
    _
  $region39: #{tpu_custom_call.1} parent=0 // pred_check_branch
    %205 = sbr.rel (0) target = $region41
  $region40: #{tpu_custom_call.1} parent=0 // pred_region
    _
  $region41: #{tpu_custom_call.1} parent=0 // pred_fallthru
    _
  // Predicated region
  $region42: #{tpu_custom_call.1} parent=0 // pred_check
    _
  $region43: #{tpu_custom_call.1} parent=0 // pred_check_branch
    %207 = sbr.rel (0) target = $region45
  $region44: #{tpu_custom_call.1} parent=0 // pred_region
    _
  $region45: #{tpu_custom_call.1} parent=0 // pred_fallthru
    _

</llo_original>
